<compile_context>
chip_gen: v7x
topology: tpu7x:2x2x1
jax: 0.10.0
libtpu: 0.0.40
codegen_flags: <defaults>
</compile_context>

<pallas_src>
import jax
import jax.numpy as jnp
from jax.experimental import pallas as pl
from jax.experimental.pallas import tpu as pltpu


def afm_kernel(idx_ref, tblcat_ref, p_ref, out_ref):
    # idx_ref    : [F, TB]  int32  feature indices, batch on the lane axis
    # tblcat_ref : [2K, V]  f32    concat(tbl.T, (tbl*tbl).T) — VMEM-resident
    # p_ref      : [K, 1]   f32    projection vector
    # out_ref    : [1, TB]  f32    sigmoid(logits), lane-dense output block
    num_fields, tb = idx_ref.shape
    two_k, vocab = tblcat_ref.shape
    k = two_k // 2

    # Multi-hot counts, transposed: counts_t[v, b] = #fields of row b with index v.
    # (Duplicate indices within a row are counted, matching gather-then-sum.)
    # Accumulate the boolean compares in int32; convert to f32 once at the end.
    vocab_ids = jax.lax.broadcasted_iota(jnp.int32, (vocab, tb), 0)
    counts_i = jnp.zeros((vocab, tb), jnp.int32)
    for f in range(num_fields):                        # F is small & static -> unrolled
        row = idx_ref[f:f + 1, :]                      # [1, TB]; sublane-broadcast in ==
        counts_i = counts_i + (row == vocab_ids).astype(jnp.int32)
    counts_t = counts_i.astype(jnp.float32)            # [V, TB], single convert

    # One fused MXU matmul: rows 0..K-1 = (sum_f e_f)^T, rows K..2K-1 = (sum_f e_f^2)^T.
    both = jnp.dot(tblcat_ref[...], counts_t, preferred_element_type=jnp.float32)  # [2K, TB]
    s_t = both[:k, :]                                  # [K, TB]
    ssq_t = both[k:, :]                                # [K, TB]
    fm_t = s_t * s_t - ssq_t                           # [K, TB]  (FMaggregator, transposed)

    # Reference attention branch is the identity (softmax over a size-1 axis == 1.0),
    # so logits = fm @ p:  VPU multiply + cross-sublane (XLU) reduce -> [1, TB].
    logits = jnp.sum(fm_t * p_ref[...], axis=0, keepdims=True)
    out_ref[...] = jax.nn.sigmoid(logits)


def afm_forward(feature_index, emb_table, p_k1, *, max_norm=1.0, block_b=256):
    """feature_index: [B, F] int, emb_table: [V, K] f32, p_k1: [K, 1] f32 -> [B] f32."""
    # nn.Embedding(max_norm=1): the lookup-time renorm depends only on the row,
    # so pre-renormalising the (tiny) table once is forward-equivalent.
    norms = jnp.sqrt(jnp.sum(emb_table * emb_table, axis=-1, keepdims=True))
    scale = jnp.where(norms > max_norm, max_norm / (norms + 1e-7), 1.0)
    tbl = (emb_table * scale).astype(jnp.float32)                   # [V, K]
    tbl_cat_t = jnp.concatenate([tbl.T, (tbl * tbl).T], axis=0)     # [2K, V]
    p_col = p_k1.astype(jnp.float32).reshape(-1, 1)                 # [K, 1]

    idx = feature_index.astype(jnp.int32)
    B, F = idx.shape
    V, K = tbl.shape

    # Lane-axis batch tile: multiple of 128.  Default 256 gives >=2 grid steps
    # per TensorCore on v7x for B=1024; bump to 512-1024 on v5e/v6e for big B.
    TB = max(128, (min(block_b, max(B, 128)) // 128) * 128)
    Bp = pl.cdiv(B, TB) * TB
    idx_t = jnp.pad(idx.T, ((0, 0), (0, Bp - B)))                   # [F, Bp]; pads use idx 0

    out = pl.pallas_call(
        afm_kernel,
        out_shape=jax.ShapeDtypeStruct((1, Bp), jnp.float32),
        grid=(Bp // TB,),
        in_specs=[
            pl.BlockSpec((F, TB), lambda b: (0, b)),       # streamed int32 indices (lane-dense rows)
            pl.BlockSpec((2 * K, V), lambda b: (0, 0)),    # resident [table^T ; (table^2)^T]
            pl.BlockSpec((K, 1), lambda b: (0, 0)),        # resident p
        ],
        out_specs=pl.BlockSpec((1, TB), lambda b: (0, b)),  # lane-dense output block
        compiler_params=pltpu.CompilerParams(
            dimension_semantics=("parallel",)),             # megacore split on v7x
    )(idx_t, tbl_cat_t, p_col)
    return out[0, :B]                                       # torch.squeeze -> [B]


def afm_reference(feature_index, emb_table, w_tk, bias_t, h_t1, p_k1, max_norm=1.0):
    """Pure-JAX reference mirroring the torch module, incl. the attention branch."""
    norms = jnp.sqrt(jnp.sum(emb_table * emb_table, axis=-1, keepdims=True))
    scale = jnp.where(norms > max_norm, max_norm / (norms + 1e-7), 1.0)
    embs = (emb_table * scale)[feature_index]                        # [B, F, K]
    fm = jnp.sum(embs, axis=1) ** 2 - jnp.sum(embs * embs, axis=1)   # [B, K]
    a = jnp.maximum(fm @ w_tk.T + bias_t[None, :], 0.0)              # [B, T]
    logits = a @ h_t1                                                # [B, 1]
    atts = jax.nn.softmax(logits, axis=1)                            # identically 1.0
    outs = jnp.sum((atts * fm) * p_k1[:, 0][None, :], axis=-1)       # [B]
    return jax.nn.sigmoid(outs)


def xavier_uniform(key, shape):
    fan_in, fan_out = shape[0], shape[1]
    a = (6.0 / (fan_in + fan_out)) ** 0.5
    return jax.random.uniform(key, shape, jnp.float32, -a, a)


if __name__ == "__main__":
    key = jax.random.PRNGKey(0)
    n_features = 64          # embedding vocabulary
    K, T = 32, 16            # embedding dim k, attention dim t
    n_users, n_items = 10, 12
    n_user_feats, n_item_feats = 3, 2   # columns of user_df / item_df
    B = 1024                 # batch of (u, i) pairs

    keys = jax.random.split(key, 9)

    emb_table = 0.5 * jax.random.normal(keys[0], (n_features, K), jnp.float32)
    # Attention params mirror AFM.__init__; they are forward-dead (softmax over
    # a size-1 axis), so only the reference uses them.
    w_tk = xavier_uniform(keys[1], (T, K))               # torch Linear weight [out, in]
    bound = 1.0 / (K ** 0.5)
    bias_t = jax.random.uniform(keys[2], (T,), jnp.float32, -bound, bound)
    h_t1 = xavier_uniform(keys[3], (T, 1))
    p_k1 = xavier_uniform(keys[4], (K, 1))

    # synthetic user_df / item_df (feature-index tables) and a batch of ids
    user_df = jax.random.randint(keys[5], (n_users, n_user_feats), 0, n_features)
    item_df = jax.random.randint(keys[6], (n_items, n_item_feats), 0, n_features)
    u = jax.random.randint(keys[7], (B,), 0, n_users)
    i = jax.random.randint(keys[8], (B,), 0, n_items)

    # __getAllFeatures (pandas .loc lookup) as plain JAX indexing
    all_feature_index = jnp.concatenate([user_df[u], item_df[i]], axis=1)   # [B, F=5]

    logit = afm_forward(all_feature_index, emb_table, p_k1)      # grid of 4 batch tiles
    jax.block_until_ready(logit)

    ref = afm_reference(all_feature_index, emb_table, w_tk, bias_t, h_t1, p_k1)
    assert logit.shape == (B,) and logit.dtype == jnp.float32
    assert bool(jnp.all((logit > 0.0) & (logit < 1.0)))
    assert bool(jnp.allclose(logit, ref, atol=3e-3, rtol=0.0))

    # Also exercise the batch-padding path (B=10 padded up to one 128-lane tile).
    small = afm_forward(all_feature_index[:10], emb_table, p_k1, block_b=128)
    jax.block_until_ready(small)
    assert small.shape == (10,)
    assert bool(jnp.allclose(small, ref[:10], atol=3e-3, rtol=0.0))

    print("KERNEL_OK")
</pallas_src>

<mosaic_0001>
module attributes {stable_mosaic.version = 11 : i64} {
  func.func @afm_kernel(%arg0: i32, %arg1: memref<5x256xi32, #tpu.memory_space<vmem>>, %arg2: memref<64x64xf32, #tpu.memory_space<vmem>>, %arg3: memref<32x1xf32, #tpu.memory_space<vmem>>, %arg4: memref<1x256xf32, #tpu.memory_space<vmem>>) attributes {dimension_semantics = [#tpu.dimension_semantics<parallel>], iteration_bounds = array<i64: 4>, scalar_prefetch = 0 : i64, scratch_operands = 0 : i64, tpu.core_type = #tpu.core_type<tc>, window_params = [{transform_indices = @transform_0, window_bounds = array<i64: 5, 256>}, {pipeline_mode = #tpu.pipeline_mode<synchronous>, transform_indices = @transform_1, window_bounds = array<i64: 64, 64>}, {pipeline_mode = #tpu.pipeline_mode<synchronous>, transform_indices = @transform_2, window_bounds = array<i64: 32, 1>}, {transform_indices = @transform_3, window_bounds = array<i64: 1, 256>}]} {
    %0 = tpu.iota {dimensions = array<i32: 0>} : vector<64x256xi32>
    %c0_i32 = arith.constant 0 : i32
    %1 = vector.broadcast %c0_i32 : i32 to vector<64x256xi32>
    %c0 = arith.constant 0 : index
    %c0_0 = arith.constant 0 : index
    %2 = vector.load %arg1[%c0, %c0_0] : memref<5x256xi32, #tpu.memory_space<vmem>>, vector<1x256xi32>
    %3 = vector.broadcast %2 : vector<1x256xi32> to vector<64x256xi32>
    %4 = arith.cmpi eq, %3, %0 : vector<64x256xi32>
    %5 = arith.extui %4 : vector<64x256xi1> to vector<64x256xi32>
    %6 = arith.addi %1, %5 : vector<64x256xi32>
    %c1 = arith.constant 1 : index
    %c0_1 = arith.constant 0 : index
    %7 = vector.load %arg1[%c1, %c0_1] : memref<5x256xi32, #tpu.memory_space<vmem>>, vector<1x256xi32>
    %8 = vector.broadcast %7 : vector<1x256xi32> to vector<64x256xi32>
    %9 = arith.cmpi eq, %8, %0 : vector<64x256xi32>
    %10 = arith.extui %9 : vector<64x256xi1> to vector<64x256xi32>
    %11 = arith.addi %6, %10 : vector<64x256xi32>
    %c2 = arith.constant 2 : index
    %c0_2 = arith.constant 0 : index
    %12 = vector.load %arg1[%c2, %c0_2] : memref<5x256xi32, #tpu.memory_space<vmem>>, vector<1x256xi32>
    %13 = vector.broadcast %12 : vector<1x256xi32> to vector<64x256xi32>
    %14 = arith.cmpi eq, %13, %0 : vector<64x256xi32>
    %15 = arith.extui %14 : vector<64x256xi1> to vector<64x256xi32>
    %16 = arith.addi %11, %15 : vector<64x256xi32>
    %c3 = arith.constant 3 : index
    %c0_3 = arith.constant 0 : index
    %17 = vector.load %arg1[%c3, %c0_3] : memref<5x256xi32, #tpu.memory_space<vmem>>, vector<1x256xi32>
    %18 = vector.broadcast %17 : vector<1x256xi32> to vector<64x256xi32>
    %19 = arith.cmpi eq, %18, %0 : vector<64x256xi32>
    %20 = arith.extui %19 : vector<64x256xi1> to vector<64x256xi32>
    %21 = arith.addi %16, %20 : vector<64x256xi32>
    %c4 = arith.constant 4 : index
    %c0_4 = arith.constant 0 : index
    %22 = vector.load %arg1[%c4, %c0_4] : memref<5x256xi32, #tpu.memory_space<vmem>>, vector<1x256xi32>
    %23 = vector.broadcast %22 : vector<1x256xi32> to vector<64x256xi32>
    %24 = arith.cmpi eq, %23, %0 : vector<64x256xi32>
    %25 = arith.extui %24 : vector<64x256xi1> to vector<64x256xi32>
    %26 = arith.addi %21, %25 : vector<64x256xi32>
    %27 = arith.sitofp %26 : vector<64x256xi32> to vector<64x256xf32>
    %c0_5 = arith.constant 0 : index
    %c0_6 = arith.constant 0 : index
    %28 = vector.load %arg2[%c0_5, %c0_6] : memref<64x64xf32, #tpu.memory_space<vmem>>, vector<64x64xf32>
    %cst = arith.constant dense<0.000000e+00> : vector<64x256xf32>
    %29 = tpu.matmul %28, %27, %cst {dimension_numbers = #tpu.dot_dimension_numbers<[1], [0], [0], [1], [0, 0, 1, 1], [], []>} : vector<64x64xf32>, vector<64x256xf32>, vector<64x256xf32> -> vector<64x256xf32>
    %30 = vector.extract_strided_slice %29 {offsets = [0, 0], sizes = [32, 256], strides = [1, 1]} : vector<64x256xf32> to vector<32x256xf32>
    %31 = vector.extract_strided_slice %29 {offsets = [32, 0], sizes = [32, 256], strides = [1, 1]} : vector<64x256xf32> to vector<32x256xf32>
    %32 = arith.mulf %30, %30 : vector<32x256xf32>
    %33 = arith.subf %32, %31 : vector<32x256xf32>
    %c0_7 = arith.constant 0 : index
    %c0_8 = arith.constant 0 : index
    %34 = vector.load %arg3[%c0_7, %c0_8] : memref<32x1xf32, #tpu.memory_space<vmem>>, vector<32x1xf32>
    %35 = vector.broadcast %34 : vector<32x1xf32> to vector<32x256xf32>
    %36 = arith.mulf %33, %35 : vector<32x256xf32>
    %cst_9 = arith.constant dense<0.000000e+00> : vector<256xf32>
    %37 = vector.multi_reduction <add>, %36, %cst_9 [0] : vector<32x256xf32> to vector<256xf32>
    %38 = vector.shape_cast %37 : vector<256xf32> to vector<1x256xf32>
    %39 = arith.negf %38 : vector<1x256xf32>
    %40 = math.exp %39 : vector<1x256xf32>
    %cst_10 = arith.constant 1.000000e+00 : f32
    %41 = vector.broadcast %cst_10 : f32 to vector<1x256xf32>
    %42 = arith.addf %41, %40 : vector<1x256xf32>
    %43 = arith.divf %41, %42 : vector<1x256xf32>
    %c0_11 = arith.constant 0 : index
    %c0_12 = arith.constant 0 : index
    %44 = vector.load %arg4[%c0_11, %c0_12] : memref<1x256xf32, #tpu.memory_space<vmem>>, vector<1x256xf32>
    tpu.vector_store %arg4[%c0_11, %c0_12], %43 {strides = array<i32>} : memref<1x256xf32, #tpu.memory_space<vmem>>, vector<1x256xf32>,
    return
  }
  func.func @transform_0(%arg0: i32) -> (i32, i32) {
    %c0_i32 = arith.constant 0 : i32
    %c0_i32_0 = arith.constant 0 : i32
    return %c0_i32, %arg0 : i32, i32
  }
  func.func @transform_1(%arg0: i32) -> (i32, i32) {
    %c0_i32 = arith.constant 0 : i32
    %c0_i32_0 = arith.constant 0 : i32
    %c0_i32_1 = arith.constant 0 : i32
    return %c0_i32, %c0_i32_0 : i32, i32
  }
  func.func @transform_2(%arg0: i32) -> (i32, i32) {
    %c0_i32 = arith.constant 0 : i32
    %c0_i32_0 = arith.constant 0 : i32
    %c0_i32_1 = arith.constant 0 : i32
    return %c0_i32, %c0_i32_0 : i32, i32
  }
  func.func @transform_3(%arg0: i32) -> (i32, i32) {
    %c0_i32 = arith.constant 0 : i32
    %c0_i32_0 = arith.constant 0 : i32
    return %c0_i32, %arg0 : i32, i32
  }
}

</mosaic_0001>

<llo_original>
// kernel: tpu_custom_call.1
$region0: #{tpu_custom_call.1}
  #allocation0 [shape = 'u32[]', space=smem, size = 0x4, offset = 0x4, fixed_abs, tag = 'smem constant byte address 0x4 - core index']
  #allocation1 [shape = 'u32[144,128]{1,0:T(1,128)}', space=vmem, size = 0x12000, scoped, tag = 'internal scratch']
  %s0 = inlined_call_operand.hbm [shape: s32[5,1024], index: 0, kind: input, shape index: {}]
  %s1 = inlined_call_operand.hbm [shape: f32[64,64], index: 1, kind: input, shape index: {}]
  %s2 = inlined_call_operand.vmem [shape: f32[32,1], index: 2, kind: input, shape index: {}]
  %s3 = inlined_call_operand.hbm [shape: f32[1,1024], index: 3, kind: output, shape index: {}]
  %s4 = sld [smem:[#allocation0]]
  $region53: #{tpu_custom_call.1} parent=0
    _
  %s6 = ssub.s32 1, %s4
  %s7 = scalar_select 0, %s6, %s4
  $region1: #{tpu_custom_call.1} parent=0
    #allocation2 [shape = 'u8[16384]{0}', space=vmem, size = 0x4000, scoped, tag = 'input window, operand 0']
    #allocation3 [shape = 's32[2]{0}', space=sflag, size = 0x8, scoped, tag = 'scoped memory for tpu_custom_call.1']
    #allocation4 [shape = 's32[2]{0}', space=sflag, size = 0x8, scoped, tag = 'scoped memory for tpu_custom_call.1']
    #allocation5 [shape = 'u8[32768]{0}', space=vmem, size = 0x8000, scoped, tag = 'input window, operand 1, single buffered']
    #allocation6 [shape = 's32[1]{0}', space=sflag, size = 0x4, scoped, tag = 'scoped memory for tpu_custom_call.1']
    #allocation7 [shape = 'u8[2048]{0}', space=vmem, size = 0x800, scoped, tag = 'output window, operand 0']
    %8 = vsyncpa [#allocation3], 0
    %s9 = scalar_lea.sflag [#allocation3], 1
    %10 = vsyncpa %s9, 0
    %11 = vsyncpa [#allocation6], 0
    %12 = vsyncpa [#allocation4], 0
    %s13 = scalar_lea.sflag [#allocation4], 1
    %14 = vsyncpa %s13, 0
    loop: start=0, step=1, limit=6
    $region2: #{tpu_custom_call.1} parent=1 // loop_pre_header
      _
    $region3: #{tpu_custom_call.1} parent=1 // loop_header
      %s16 = sphi 0, %s20
      %p17 = scmp.ge.s32.totalorder %s16, 6
      %s26 = sphi 0, %s28
      %s29 = sphi 0, %s26
      %s30 = sphi 0, %s29
      %s46 = sphi 0, %s30
      %s50 = sphi 0, %s50
      %s52 = sphi 0, %s50
      %s53 = sphi 0, %s52
      %s67 = sphi 0, %s53
      %s71 = sphi 0, %s71
      %s73 = sphi 0, %s71
      %s74 = sphi 0, %s73
      %s88 = sphi 0, %s74
      %s94 = sphi 0, %s96
      %s97 = sphi 0, %s94
      %s98 = sphi 0, %s97
      %s114 = sphi 0, %s98
    $region4: #{tpu_custom_call.1} parent=1 // loop_header_branch
      %19 = sbr.rel (%p17) target = $region8
    $region5: #{tpu_custom_call.1} parent=1 // loop_body
      %s21 = ssub.s32 %s16, 1
      %s22 = ssub.s32 %s16, 2
      %s23 = sadd.s32 %s16, 1
      %s24 = ssub.s32 %s16, %s23
      %p25 = scmp.eq.s32.totalorder %s24, 0
      %s27 = sadd.s32 %s26, 1
      %s28 = scalar_select %p25, %s26, %s27
      %p31 = pneg %p25
      %p32 = scmp.eq.s32.totalorder %s16, 3
      %p33 = por %p31, %p32
      %p34 = scmp.ne.s32.totalorder %s26, %s29
      %p35 = scmp.eq.s32.totalorder %s16, 0
      %p36 = por %p34, %p35
      %p37 = scmp.ne.s32.totalorder %s26, %s29
      %p38 = scmp.eq.s32.totalorder %s21, 3
      %p39 = por %p37, %p38
      %p40 = scmp.ne.s32.totalorder %s29, %s30
      %p41 = scmp.eq.s32.totalorder %s21, 0
      %p42 = por %p40, %p41
      %p43 = scmp.ne.s32.totalorder %s29, %s30
      %p44 = scmp.eq.s32.totalorder %s22, 3
      %p45 = por %p43, %p44
      %p47 = scmp.ne.s32.totalorder %s30, %s46
      %p48 = scmp.eq.s32.totalorder %s22, 0
      %p49 = por %p47, %p48
      %s51 = sadd.s32 %s50, 1
      %p54 = scmp.eq.s32.totalorder %s16, 3
      %p55 = scmp.ne.s32.totalorder %s50, %s52
      %p56 = scmp.eq.s32.totalorder %s16, 0
      %p57 = por %p55, %p56
      %p58 = scmp.ne.s32.totalorder %s50, %s52
      %p59 = scmp.eq.s32.totalorder %s21, 3
      %p60 = por %p58, %p59
      %p61 = scmp.ne.s32.totalorder %s52, %s53
      %p62 = scmp.eq.s32.totalorder %s21, 0
      %p63 = por %p61, %p62
      %p64 = scmp.ne.s32.totalorder %s52, %s53
      %p65 = scmp.eq.s32.totalorder %s22, 3
      %p66 = por %p64, %p65
      %p68 = scmp.ne.s32.totalorder %s53, %s67
      %p69 = scmp.eq.s32.totalorder %s22, 0
      %p70 = por %p68, %p69
      %s72 = sadd.s32 %s71, 1
      %p75 = scmp.eq.s32.totalorder %s16, 3
      %p76 = scmp.ne.s32.totalorder %s71, %s73
      %p77 = scmp.eq.s32.totalorder %s16, 0
      %p78 = por %p76, %p77
      %p79 = scmp.ne.s32.totalorder %s71, %s73
      %p80 = scmp.eq.s32.totalorder %s21, 3
      %p81 = por %p79, %p80
      %p82 = scmp.ne.s32.totalorder %s73, %s74
      %p83 = scmp.eq.s32.totalorder %s21, 0
      %p84 = por %p82, %p83
      %p85 = scmp.ne.s32.totalorder %s73, %s74
      %p86 = scmp.eq.s32.totalorder %s22, 3
      %p87 = por %p85, %p86
      %p89 = scmp.ne.s32.totalorder %s74, %s88
      %p90 = scmp.eq.s32.totalorder %s22, 0
      %p91 = por %p89, %p90
      %s92 = ssub.s32 %s16, %s23
      %p93 = scmp.eq.s32.totalorder %s92, 0
      %s95 = sadd.s32 %s94, 1
      %s96 = scalar_select %p93, %s94, %s95
      %p99 = pneg %p93
      %p100 = scmp.eq.s32.totalorder %s16, 3
      %p101 = por %p99, %p100
      %p102 = scmp.ne.s32.totalorder %s94, %s97
      %p103 = scmp.eq.s32.totalorder %s16, 0
      %p104 = por %p102, %p103
      %p105 = scmp.ne.s32.totalorder %s94, %s97
      %p106 = scmp.eq.s32.totalorder %s21, 3
      %p107 = por %p105, %p106
      %p108 = scmp.ne.s32.totalorder %s97, %s98
      %p109 = scmp.eq.s32.totalorder %s21, 0
      %p110 = por %p108, %p109
      %p111 = scmp.ne.s32.totalorder %s97, %s98
      %p112 = scmp.eq.s32.totalorder %s22, 3
      %p113 = por %p111, %p112
      %p115 = scmp.ne.s32.totalorder %s98, %s114
      %p116 = scmp.eq.s32.totalorder %s22, 0
      %p117 = por %p115, %p116
      %p118 = scmp.le.s32.totalorder 1, %s16
      %p119 = scmp.lt.s32.totalorder %s16, 5
      %p120 = pnand %p118, %p119
      %p121 = pneg %p120
      // Predicated region
      $region9: #{tpu_custom_call.1} parent=5 // pred_check
        _
      $region10: #{tpu_custom_call.1} parent=5 // pred_check_branch
        %123 = sbr.rel (%p120) target = $region12
      $region11: #{tpu_custom_call.1} parent=5 // pred_region
        %s124 = ssub.s32 %s16, 1
        // Predicated region
        $region13: #{tpu_custom_call.1} parent=11 // pred_check
          %p125 = pneg %p63
        $region14: #{tpu_custom_call.1} parent=11 // pred_check_branch
          %127 = sbr.rel (%p125) target = $region16
        $region15: #{tpu_custom_call.1} parent=11 // pred_region
          %s129 = ssub.s32 1024, 1024
          %130 = vsyncadd [#allocation6], %s129
          %s131 = sshll.u32 [#allocation5], 4
          %s132 = int_to_ptr.vmem [resolvable:$true] %s131
          %137 = dma.hbm_to_vmem [thread:$0]  %s1, 1024, %s132, [#allocation6], 128, 128, 8
        $region16: #{tpu_custom_call.1} parent=11 // pred_fallthru
          _
        // Predicated region
        $region17: #{tpu_custom_call.1} parent=11 // pred_check
          %p138 = pneg %p84
        $region18: #{tpu_custom_call.1} parent=11 // pred_check_branch
          %140 = sbr.rel (%p138) target = $region20
        $region19: #{tpu_custom_call.1} parent=11 // pred_region
          _
        $region20: #{tpu_custom_call.1} parent=11 // pred_fallthru
          _
      $region12: #{tpu_custom_call.1} parent=5 // pred_fallthru
        _
      %p141 = scmp.lt.s32.totalorder %s16, 4
      // Predicated region
      $region21: #{tpu_custom_call.1} parent=5 // pred_check
        %p142 = pneg %p141
      $region22: #{tpu_custom_call.1} parent=5 // pred_check_branch
        %144 = sbr.rel (%p142) target = $region24
      $region23: #{tpu_custom_call.1} parent=5 // pred_region
        // Predicated region
        $region25: #{tpu_custom_call.1} parent=23 // pred_check
          %p145 = pneg %p36
        $region26: #{tpu_custom_call.1} parent=23 // pred_check_branch
          %147 = sbr.rel (%p145) target = $region28
        $region27: #{tpu_custom_call.1} parent=23 // pred_region
          %s148 = sand.u32 %s26, 1
          %s149 = scalar_lea.sflag [#allocation3], %s148
          %s150 = sand.u32 %s26, 1
          %s151 = smul.addr %s150, 16
          %s152 = scalar_lea.vmem [#allocation2], %s151
          %s153 = smul.u32 2, %s16
          %s155 = ssub.s32 256, 256
          %156 = vsyncadd %s149, %s155
          %s157 = smul.addr %s153, 128
          %s158 = scalar_lea.hbm %s0, %s157
          %s160 = sshll.u32 %s152, 4
          %s161 = int_to_ptr.vmem [resolvable:$true] %s160
          %163 = dma.hbm_to_vmem [thread:$0]  %s158, 256, %s161, %s149
        $region28: #{tpu_custom_call.1} parent=23 // pred_fallthru
          _
      $region24: #{tpu_custom_call.1} parent=5 // pred_fallthru
        _
      %p164 = scmp.le.s32.totalorder 1, %s16
      %p165 = scmp.lt.s32.totalorder %s16, 5
      %p166 = pnand %p164, %p165
      %p167 = pneg %p166
      // Predicated region
      $region29: #{tpu_custom_call.1} parent=5 // pred_check
        _
      $region30: #{tpu_custom_call.1} parent=5 // pred_check_branch
        %169 = sbr.rel (%p166) target = $region32
      $region31: #{tpu_custom_call.1} parent=5 // pred_region
        %s170 = ssub.s32 %s16, 1
        %s171 = sand.u32 %s29, 1
        %s172 = scalar_lea.sflag [#allocation3], %s171
        %s173 = sand.u32 %s29, 1
        %s174 = smul.addr %s173, 16
        %s175 = scalar_lea.vmem [#allocation2], %s174
        // Predicated region
        $region33: #{tpu_custom_call.1} parent=31 // pred_check
          %p176 = pneg %p42
        $region34: #{tpu_custom_call.1} parent=31 // pred_check_branch
          %178 = sbr.rel (%p176) target = $region36
        $region35: #{tpu_custom_call.1} parent=31 // pred_region
          %179 = dma.done %s172, 256
        $region36: #{tpu_custom_call.1} parent=31 // pred_fallthru
          _
        // Predicated region
        $region37: #{tpu_custom_call.1} parent=31 // pred_check
          %p180 = pneg %p63
        $region38: #{tpu_custom_call.1} parent=31 // pred_check_branch
          %182 = sbr.rel (%p180) target = $region40
        $region39: #{tpu_custom_call.1} parent=31 // pred_region
          %183 = dma.done [#allocation6], 1024
        $region40: #{tpu_custom_call.1} parent=31 // pred_fallthru
          _
        %s184 = sand.u32 %s29, 1
        %s185 = scalar_lea.sflag [#allocation3], %s184
        %s186 = sand.u32 %s29, 1
        %s187 = smul.addr %s186, 16
        %s188 = scalar_lea.vmem [#allocation2], %s187
        %p189 = pneg %p42
        %p190 = pneg %p39
        %p191 = pneg %p63
        %p192 = pneg %p60
        %p193 = pneg %p84
        %p194 = pneg %p81
        %p195 = pneg %p110
        %p196 = pneg %p107
        %s197 = sand.u32 %s97, 1
        %s198 = scalar_lea.sflag [#allocation4], %s197
        %s199 = sand.u32 %s97, 1
        %s200 = smul.addr %s199, 2
        %s201 = scalar_lea.vmem [#allocation7], %s200
        %s202 = smul.u32 2, %s21
        %s203 = smul.u32 2, %s21
        %v204 = vlaneseq
        %v205 = vshrl.u32 %v204, 7
        %v206 = vadd.s32 %v205, 8
        %v207 = vadd.s32 %v205, 16
        %v208 = vadd.s32 %v205, 24
        %v209 = vadd.s32 %v205, 32
        %v210 = vadd.s32 %v205, 40
        %v211 = vadd.s32 %v205, 48
        %v212 = vadd.s32 %v205, 56
        %v213 = vld [vmem:[%s175] ss:$8 sm:$0x3]
        %v214 = vlaneseq
        %v215 = vshrl.u32 %v214, 7
        %v216 = vsub.s32 0, %v215
        %v217 = vrot.slane %v213, %v216
        %v218 = vlaneseq
        %v219 = vshrl.u32 %v218, 7
        %v220 = vsub.s32 1, %v219
        %v221 = vrot.slane %v213, %v220
        %vm222 = vcmp.eq.s32.totalorder %v217, %v205
        %vm223 = vcmp.eq.s32.totalorder %v221, %v205
        %vm224 = vcmp.eq.s32.totalorder %v217, %v206
        %vm225 = vcmp.eq.s32.totalorder %v221, %v206
        %vm226 = vcmp.eq.s32.totalorder %v217, %v207
        %vm227 = vcmp.eq.s32.totalorder %v221, %v207
        %vm228 = vcmp.eq.s32.totalorder %v217, %v208
        %vm229 = vcmp.eq.s32.totalorder %v221, %v208
        %vm230 = vcmp.eq.s32.totalorder %v217, %v209
        %vm231 = vcmp.eq.s32.totalorder %v221, %v209
        %vm232 = vcmp.eq.s32.totalorder %v217, %v210
        %vm233 = vcmp.eq.s32.totalorder %v221, %v210
        %vm234 = vcmp.eq.s32.totalorder %v217, %v211
        %vm235 = vcmp.eq.s32.totalorder %v221, %v211
        %vm236 = vcmp.eq.s32.totalorder %v217, %v212
        %vm237 = vcmp.eq.s32.totalorder %v221, %v212
        %v238 = vsel %vm222, 1, 0
        %v239 = vsel %vm223, 1, 0
        %v240 = vsel %vm224, 1, 0
        %v241 = vsel %vm225, 1, 0
        %v242 = vsel %vm226, 1, 0
        %v243 = vsel %vm227, 1, 0
        %v244 = vsel %vm228, 1, 0
        %v245 = vsel %vm229, 1, 0
        %v246 = vsel %vm230, 1, 0
        %v247 = vsel %vm231, 1, 0
        %v248 = vsel %vm232, 1, 0
        %v249 = vsel %vm233, 1, 0
        %v250 = vsel %vm234, 1, 0
        %v251 = vsel %vm235, 1, 0
        %v252 = vsel %vm236, 1, 0
        %v253 = vsel %vm237, 1, 0
        %s254 = scalar_lea.vmem %s175, 1 [#allocation2]
        %v255 = vld [vmem:[%s254] ss:$8 sm:$0x3]
        %v256 = vlaneseq
        %v257 = vshrl.u32 %v256, 7
        %v258 = vsub.s32 0, %v257
        %v259 = vrot.slane %v255, %v258
        %v260 = vlaneseq
        %v261 = vshrl.u32 %v260, 7
        %v262 = vsub.s32 1, %v261
        %v263 = vrot.slane %v255, %v262
        %vm264 = vcmp.eq.s32.totalorder %v259, %v205
        %vm265 = vcmp.eq.s32.totalorder %v263, %v205
        %vm266 = vcmp.eq.s32.totalorder %v259, %v206
        %vm267 = vcmp.eq.s32.totalorder %v263, %v206
        %vm268 = vcmp.eq.s32.totalorder %v259, %v207
        %vm269 = vcmp.eq.s32.totalorder %v263, %v207
        %vm270 = vcmp.eq.s32.totalorder %v259, %v208
        %vm271 = vcmp.eq.s32.totalorder %v263, %v208
        %vm272 = vcmp.eq.s32.totalorder %v259, %v209
        %vm273 = vcmp.eq.s32.totalorder %v263, %v209
        %vm274 = vcmp.eq.s32.totalorder %v259, %v210
        %vm275 = vcmp.eq.s32.totalorder %v263, %v210
        %vm276 = vcmp.eq.s32.totalorder %v259, %v211
        %vm277 = vcmp.eq.s32.totalorder %v263, %v211
        %vm278 = vcmp.eq.s32.totalorder %v259, %v212
        %vm279 = vcmp.eq.s32.totalorder %v263, %v212
        %v280 = vsel %vm264, 1, 0
        %v281 = vsel %vm265, 1, 0
        %v282 = vsel %vm266, 1, 0
        %v283 = vsel %vm267, 1, 0
        %v284 = vsel %vm268, 1, 0
        %v285 = vsel %vm269, 1, 0
        %v286 = vsel %vm270, 1, 0
        %v287 = vsel %vm271, 1, 0
        %v288 = vsel %vm272, 1, 0
        %v289 = vsel %vm273, 1, 0
        %v290 = vsel %vm274, 1, 0
        %v291 = vsel %vm275, 1, 0
        %v292 = vsel %vm276, 1, 0
        %v293 = vsel %vm277, 1, 0
        %v294 = vsel %vm278, 1, 0
        %v295 = vsel %vm279, 1, 0
        %v296 = vadd.s32 %v238, %v280
        %v297 = vadd.s32 %v239, %v281
        %v298 = vadd.s32 %v240, %v282
        %v299 = vadd.s32 %v241, %v283
        %v300 = vadd.s32 %v242, %v284
        %v301 = vadd.s32 %v243, %v285
        %v302 = vadd.s32 %v244, %v286
        %v303 = vadd.s32 %v245, %v287
        %v304 = vadd.s32 %v246, %v288
        %v305 = vadd.s32 %v247, %v289
        %v306 = vadd.s32 %v248, %v290
        %v307 = vadd.s32 %v249, %v291
        %v308 = vadd.s32 %v250, %v292
        %v309 = vadd.s32 %v251, %v293
        %v310 = vadd.s32 %v252, %v294
        %v311 = vadd.s32 %v253, %v295
        %s312 = scalar_lea.vmem %s175, 2 [#allocation2]
        %v313 = vld [vmem:[%s312] ss:$8 sm:$0x3]
        %v314 = vlaneseq
        %v315 = vshrl.u32 %v314, 7
        %v316 = vsub.s32 0, %v315
        %v317 = vrot.slane %v313, %v316
        %v318 = vlaneseq
        %v319 = vshrl.u32 %v318, 7
        %v320 = vsub.s32 1, %v319
        %v321 = vrot.slane %v313, %v320
        %vm322 = vcmp.eq.s32.totalorder %v317, %v205
        %vm323 = vcmp.eq.s32.totalorder %v321, %v205
        %vm324 = vcmp.eq.s32.totalorder %v317, %v206
        %vm325 = vcmp.eq.s32.totalorder %v321, %v206
        %vm326 = vcmp.eq.s32.totalorder %v317, %v207
        %vm327 = vcmp.eq.s32.totalorder %v321, %v207
        %vm328 = vcmp.eq.s32.totalorder %v317, %v208
        %vm329 = vcmp.eq.s32.totalorder %v321, %v208
        %vm330 = vcmp.eq.s32.totalorder %v317, %v209
        %vm331 = vcmp.eq.s32.totalorder %v321, %v209
        %vm332 = vcmp.eq.s32.totalorder %v317, %v210
        %vm333 = vcmp.eq.s32.totalorder %v321, %v210
        %vm334 = vcmp.eq.s32.totalorder %v317, %v211
        %vm335 = vcmp.eq.s32.totalorder %v321, %v211
        %vm336 = vcmp.eq.s32.totalorder %v317, %v212
        %vm337 = vcmp.eq.s32.totalorder %v321, %v212
        %v338 = vsel %vm322, 1, 0
        %v339 = vsel %vm323, 1, 0
        %v340 = vsel %vm324, 1, 0
        %v341 = vsel %vm325, 1, 0
        %v342 = vsel %vm326, 1, 0
        %v343 = vsel %vm327, 1, 0
        %v344 = vsel %vm328, 1, 0
        %v345 = vsel %vm329, 1, 0
        %v346 = vsel %vm330, 1, 0
        %v347 = vsel %vm331, 1, 0
        %v348 = vsel %vm332, 1, 0
        %v349 = vsel %vm333, 1, 0
        %v350 = vsel %vm334, 1, 0
        %v351 = vsel %vm335, 1, 0
        %v352 = vsel %vm336, 1, 0
        %v353 = vsel %vm337, 1, 0
        %v354 = vadd.s32 %v296, %v338
        %v355 = vadd.s32 %v297, %v339
        %v356 = vadd.s32 %v298, %v340
        %v357 = vadd.s32 %v299, %v341
        %v358 = vadd.s32 %v300, %v342
        %v359 = vadd.s32 %v301, %v343
        %v360 = vadd.s32 %v302, %v344
        %v361 = vadd.s32 %v303, %v345
        %v362 = vadd.s32 %v304, %v346
        %v363 = vadd.s32 %v305, %v347
        %v364 = vadd.s32 %v306, %v348
        %v365 = vadd.s32 %v307, %v349
        %v366 = vadd.s32 %v308, %v350
        %v367 = vadd.s32 %v309, %v351
        %v368 = vadd.s32 %v310, %v352
        %v369 = vadd.s32 %v311, %v353
        %s370 = scalar_lea.vmem %s175, 3 [#allocation2]
        %v371 = vld [vmem:[%s370] ss:$8 sm:$0x3]
        %v372 = vlaneseq
        %v373 = vshrl.u32 %v372, 7
        %v374 = vsub.s32 0, %v373
        %v375 = vrot.slane %v371, %v374
        %v376 = vlaneseq
        %v377 = vshrl.u32 %v376, 7
        %v378 = vsub.s32 1, %v377
        %v379 = vrot.slane %v371, %v378
        %vm380 = vcmp.eq.s32.totalorder %v375, %v205
        %vm381 = vcmp.eq.s32.totalorder %v379, %v205
        %vm382 = vcmp.eq.s32.totalorder %v375, %v206
        %vm383 = vcmp.eq.s32.totalorder %v379, %v206
        %vm384 = vcmp.eq.s32.totalorder %v375, %v207
        %vm385 = vcmp.eq.s32.totalorder %v379, %v207
        %vm386 = vcmp.eq.s32.totalorder %v375, %v208
        %vm387 = vcmp.eq.s32.totalorder %v379, %v208
        %vm388 = vcmp.eq.s32.totalorder %v375, %v209
        %vm389 = vcmp.eq.s32.totalorder %v379, %v209
        %vm390 = vcmp.eq.s32.totalorder %v375, %v210
        %vm391 = vcmp.eq.s32.totalorder %v379, %v210
        %vm392 = vcmp.eq.s32.totalorder %v375, %v211
        %vm393 = vcmp.eq.s32.totalorder %v379, %v211
        %vm394 = vcmp.eq.s32.totalorder %v375, %v212
        %vm395 = vcmp.eq.s32.totalorder %v379, %v212
        %v396 = vsel %vm380, 1, 0
        %v397 = vsel %vm381, 1, 0
        %v398 = vsel %vm382, 1, 0
        %v399 = vsel %vm383, 1, 0
        %v400 = vsel %vm384, 1, 0
        %v401 = vsel %vm385, 1, 0
        %v402 = vsel %vm386, 1, 0
        %v403 = vsel %vm387, 1, 0
        %v404 = vsel %vm388, 1, 0
        %v405 = vsel %vm389, 1, 0
        %v406 = vsel %vm390, 1, 0
        %v407 = vsel %vm391, 1, 0
        %v408 = vsel %vm392, 1, 0
        %v409 = vsel %vm393, 1, 0
        %v410 = vsel %vm394, 1, 0
        %v411 = vsel %vm395, 1, 0
        %v412 = vadd.s32 %v354, %v396
        %v413 = vadd.s32 %v355, %v397
        %v414 = vadd.s32 %v356, %v398
        %v415 = vadd.s32 %v357, %v399
        %v416 = vadd.s32 %v358, %v400
        %v417 = vadd.s32 %v359, %v401
        %v418 = vadd.s32 %v360, %v402
        %v419 = vadd.s32 %v361, %v403
        %v420 = vadd.s32 %v362, %v404
        %v421 = vadd.s32 %v363, %v405
        %v422 = vadd.s32 %v364, %v406
        %v423 = vadd.s32 %v365, %v407
        %v424 = vadd.s32 %v366, %v408
        %v425 = vadd.s32 %v367, %v409
        %v426 = vadd.s32 %v368, %v410
        %v427 = vadd.s32 %v369, %v411
        %s428 = scalar_lea.vmem %s175, 4 [#allocation2]
        %v429 = vld [vmem:[%s428] ss:$8 sm:$0x3]
        %v430 = vlaneseq
        %v431 = vshrl.u32 %v430, 7
        %v432 = vsub.s32 0, %v431
        %v433 = vrot.slane %v429, %v432
        %v434 = vlaneseq
        %v435 = vshrl.u32 %v434, 7
        %v436 = vsub.s32 1, %v435
        %v437 = vrot.slane %v429, %v436
        %vm438 = vcmp.eq.s32.totalorder %v433, %v205
        %vm439 = vcmp.eq.s32.totalorder %v437, %v205
        %vm440 = vcmp.eq.s32.totalorder %v433, %v206
        %vm441 = vcmp.eq.s32.totalorder %v437, %v206
        %vm442 = vcmp.eq.s32.totalorder %v433, %v207
        %vm443 = vcmp.eq.s32.totalorder %v437, %v207
        %vm444 = vcmp.eq.s32.totalorder %v433, %v208
        %vm445 = vcmp.eq.s32.totalorder %v437, %v208
        %vm446 = vcmp.eq.s32.totalorder %v433, %v209
        %vm447 = vcmp.eq.s32.totalorder %v437, %v209
        %vm448 = vcmp.eq.s32.totalorder %v433, %v210
        %vm449 = vcmp.eq.s32.totalorder %v437, %v210
        %vm450 = vcmp.eq.s32.totalorder %v433, %v211
        %vm451 = vcmp.eq.s32.totalorder %v437, %v211
        %vm452 = vcmp.eq.s32.totalorder %v433, %v212
        %vm453 = vcmp.eq.s32.totalorder %v437, %v212
        %v454 = vsel %vm438, 1, 0
        %v455 = vsel %vm439, 1, 0
        %v456 = vsel %vm440, 1, 0
        %v457 = vsel %vm441, 1, 0
        %v458 = vsel %vm442, 1, 0
        %v459 = vsel %vm443, 1, 0
        %v460 = vsel %vm444, 1, 0
        %v461 = vsel %vm445, 1, 0
        %v462 = vsel %vm446, 1, 0
        %v463 = vsel %vm447, 1, 0
        %v464 = vsel %vm448, 1, 0
        %v465 = vsel %vm449, 1, 0
        %v466 = vsel %vm450, 1, 0
        %v467 = vsel %vm451, 1, 0
        %v468 = vsel %vm452, 1, 0
        %v469 = vsel %vm453, 1, 0
        %v470 = vadd.s32 %v412, %v454
        %v471 = vadd.s32 %v413, %v455
        %v472 = vadd.s32 %v414, %v456
        %v473 = vadd.s32 %v415, %v457
        %v474 = vadd.s32 %v416, %v458
        %v475 = vadd.s32 %v417, %v459
        %v476 = vadd.s32 %v418, %v460
        %v477 = vadd.s32 %v419, %v461
        %v478 = vadd.s32 %v420, %v462
        %v479 = vadd.s32 %v421, %v463
        %v480 = vadd.s32 %v422, %v464
        %v481 = vadd.s32 %v423, %v465
        %v482 = vadd.s32 %v424, %v466
        %v483 = vadd.s32 %v425, %v467
        %v484 = vadd.s32 %v426, %v468
        %v485 = vadd.s32 %v427, %v469
        %v486 = vcvt.s32.f32 %v470
        %v487 = vcvt.s32.f32 %v471
        %v488 = vcvt.s32.f32 %v472
        %v489 = vcvt.s32.f32 %v473
        %v490 = vcvt.s32.f32 %v474
        %v491 = vcvt.s32.f32 %v475
        %v492 = vcvt.s32.f32 %v476
        %v493 = vcvt.s32.f32 %v477
        %v494 = vcvt.s32.f32 %v478
        %v495 = vcvt.s32.f32 %v479
        %v496 = vcvt.s32.f32 %v480
        %v497 = vcvt.s32.f32 %v481
        %v498 = vcvt.s32.f32 %v482
        %v499 = vcvt.s32.f32 %v483
        %v500 = vcvt.s32.f32 %v484
        %v501 = vcvt.s32.f32 %v485
        %v502 = vld [vmem:[#allocation5] sm:$0xff]
        %v503 = vld [vmem:[#allocation5 + $0x8] sm:$0xff]
        %v504 = vld [vmem:[#allocation5 + $0x10] sm:$0xff]
        %v505 = vld [vmem:[#allocation5 + $0x18] sm:$0xff]
        %v506 = vld [vmem:[#allocation5 + $0x20] sm:$0xff]
        %v507 = vld [vmem:[#allocation5 + $0x28] sm:$0xff]
        %v508 = vld [vmem:[#allocation5 + $0x30] sm:$0xff]
        %v509 = vld [vmem:[#allocation5 + $0x38] sm:$0xff]
        %vm510 = vcmask 523264
        %v512 = vsel %vm510, %v502, 0
        %v515 = vsel %vm510, %v503, 0
        %v518 = vsel %vm510, %v504, 0
        %v521 = vsel %vm510, %v505, 0
        %v524 = vsel %vm510, %v506, 0
        %v527 = vsel %vm510, %v507, 0
        %v530 = vsel %vm510, %v508, 0
        %v533 = vsel %vm510, %v509, 0
        %535 = vmatprep.subr.mxu0 %v487
        %536 = vmatpush1.msra.mxu0 %v486
        %537 = vmatprep.subr.mxu0 %v489
        %538 = vmatpush1.msra.mxu0 %v488
        %539 = vmatprep.subr.mxu0 %v491
        %540 = vmatpush1.msra.mxu0 %v490
        %541 = vmatprep.subr.mxu0 %v493
        %542 = vmatpush1.msra.mxu0 %v492
        %543 = vmatprep.subr.mxu0 %v495
        %544 = vmatpush1.msra.mxu0 %v494
        %545 = vmatprep.subr.mxu0 %v497
        %546 = vmatpush1.msra.mxu0 %v496
        %547 = vmatprep.subr.mxu0 %v499
        %548 = vmatpush1.msra.mxu0 %v498
        %549 = vmatprep.subr.mxu0 %v501
        %550 = vmatpush1.msra.mxu0 %v500
        %551 = vmatprep.subr.mxu0 0.0
        %552 = vmatpush1.msra.mxu0 0.0
        %553 = vmatprep.subr.mxu0 0.0
        %554 = vmatpush1.msra.mxu0 0.0
        %555 = vmatprep.subr.mxu0 0.0
        %556 = vmatpush1.msra.mxu0 0.0
        %557 = vmatprep.subr.mxu0 0.0
        %558 = vmatpush1.msra.mxu0 0.0
        %559 = vmatprep.subr.mxu0 0.0
        %560 = vmatpush1.msra.mxu0 0.0
        %561 = vmatprep.subr.mxu0 0.0
        %562 = vmatpush1.msra.mxu0 0.0
        %563 = vmatprep.subr.mxu0 0.0
        %564 = vmatpush1.msra.mxu0 0.0
        %565 = vmatprep.subr.mxu0 0.0
        %566 = vmatpush1.msra.mxu0 0.0
        %567 = vmatprep.subr.mxu0 0.0
        %568 = vmatpush1.msra.mxu0 0.0
        %569 = vmatprep.subr.mxu0 0.0
        %570 = vmatpush1.msra.mxu0 0.0
        %571 = vmatprep.subr.mxu0 0.0
        %572 = vmatpush1.msra.mxu0 0.0
        %573 = vmatprep.subr.mxu0 0.0
        %574 = vmatpush1.msra.mxu0 0.0
        %575 = vmatprep.subr.mxu0 0.0
        %576 = vmatpush1.msra.mxu0 0.0
        %577 = vmatprep.subr.mxu0 0.0
        %578 = vmatpush1.msra.mxu0 0.0
        %579 = vmatprep.subr.mxu0 0.0
        %580 = vmatpush1.msra.mxu0 0.0
        %581 = vmatprep.subr.mxu0 0.0
        %582 = vmatpush1.msra.mxu0 0.0
        %583 = vmatprep.subr.mxu0 0.0
        %584 = vmatpush1.msra.mxu0 0.0
        %585 = vmatprep.subr.mxu0 0.0
        %586 = vmatpush1.msra.mxu0 0.0
        %587 = vmatprep.subr.mxu0 0.0
        %588 = vmatpush1.msra.mxu0 0.0
        %589 = vmatprep.subr.mxu0 0.0
        %590 = vmatpush1.msra.mxu0 0.0
        %591 = vmatprep.subr.mxu0 0.0
        %592 = vmatpush1.msra.mxu0 0.0
        %593 = vmatprep.subr.mxu0 0.0
        %594 = vmatpush1.msra.mxu0 0.0
        %595 = vmatprep.subr.mxu0 0.0
        %596 = vmatpush1.msra.mxu0 0.0
        %597 = vmatprep.subr.mxu0 0.0
        %598 = vmatpush1.msra.mxu0 0.0
        %599 = vmatprep.mubr.f32.mxu0 0.0
        %600 = vmatmul.mubr.f32.gmra.mrb[0].mxu0 %v512
        %v601 = vpop.f32.mrb[0].mxu0
        %v602 = vadd.f32 0.0, %v601
        %v603 = vpop.f32.mrb[0].mxu0
        %v604 = vadd.f32 0.0, %v603
        %605 = vmatprep.mubr.f32.mxu0 0.0
        %606 = vmatmul.mubr.f32.gmra.mrb[0].mxu0 %v515
        %v607 = vpop.f32.mrb[0].mxu0
        %v608 = vadd.f32 0.0, %v607
        %v609 = vpop.f32.mrb[0].mxu0
        %v610 = vadd.f32 0.0, %v609
        %611 = vmatprep.mubr.f32.mxu0 0.0
        %612 = vmatmul.mubr.f32.gmra.mrb[0].mxu0 %v518
        %v613 = vpop.f32.mrb[0].mxu0
        %v614 = vadd.f32 0.0, %v613
        %v615 = vpop.f32.mrb[0].mxu0
        %v616 = vadd.f32 0.0, %v615
        %617 = vmatprep.mubr.f32.mxu0 0.0
        %618 = vmatmul.mubr.f32.gmra.mrb[0].mxu0 %v521
        %v619 = vpop.f32.mrb[0].mxu0
        %v620 = vadd.f32 0.0, %v619
        %v621 = vpop.f32.mrb[0].mxu0
        %v622 = vadd.f32 0.0, %v621
        %623 = vmatprep.mubr.f32.mxu0 0.0
        %624 = vmatmul.mubr.f32.gmra.mrb[0].mxu0 %v524
        %v625 = vpop.f32.mrb[0].mxu0
        %v626 = vadd.f32 0.0, %v625
        %v627 = vpop.f32.mrb[0].mxu0
        %v628 = vadd.f32 0.0, %v627
        %629 = vmatprep.mubr.f32.mxu0 0.0
        %630 = vmatmul.mubr.f32.gmra.mrb[0].mxu0 %v527
        %v631 = vpop.f32.mrb[0].mxu0
        %v632 = vadd.f32 0.0, %v631
        %v633 = vpop.f32.mrb[0].mxu0
        %v634 = vadd.f32 0.0, %v633
        %635 = vmatprep.mubr.f32.mxu0 0.0
        %636 = vmatmul.mubr.f32.gmra.mrb[0].mxu0 %v530
        %v637 = vpop.f32.mrb[0].mxu0
        %v638 = vadd.f32 0.0, %v637
        %v639 = vpop.f32.mrb[0].mxu0
        %v640 = vadd.f32 0.0, %v639
        %641 = vmatprep.mubr.f32.mxu0 0.0
        %642 = vmatmul.mubr.f32.gmra.mrb[0].mxu0 %v533
        %v643 = vpop.f32.mrb[0].mxu0
        %v644 = vadd.f32 0.0, %v643
        %v645 = vpop.f32.mrb[0].mxu0
        %v646 = vadd.f32 0.0, %v645
        %647 = vdwg.mxu0
        %v648 = vmul.f32 %v602, %v602
        %v649 = vmul.f32 %v604, %v604
        %v650 = vmul.f32 %v608, %v608
        %v651 = vmul.f32 %v610, %v610
        %v652 = vmul.f32 %v614, %v614
        %v653 = vmul.f32 %v616, %v616
        %v654 = vmul.f32 %v620, %v620
        %v655 = vmul.f32 %v622, %v622
        %v656 = vsub.f32 %v648, %v626
        %v657 = vsub.f32 %v649, %v628
        %v658 = vsub.f32 %v650, %v632
        %v659 = vsub.f32 %v651, %v634
        %v660 = vsub.f32 %v652, %v638
        %v661 = vsub.f32 %v653, %v640
        %v662 = vsub.f32 %v654, %v644
        %v663 = vsub.f32 %v655, %v646
        %v664 = vld [vmem:[%s2] sm:$0xff]
        %v665 = vld [vmem:[%s2 + $0x8] sm:$0xff]
        %v666 = vld [vmem:[%s2 + $0x10] sm:$0xff]
        %v667 = vld [vmem:[%s2 + $0x18] sm:$0xff]
        %669 = vset.pattern.permute.xlu0 0
        %670 = vperm.xlu0 %669, %v664
        %v671 = vpop.permute.xlu0 %670
        %674 = vset.pattern.permute.xlu0 0
        %675 = vperm.xlu0 %674, %v665
        %v676 = vpop.permute.xlu0 %675
        %679 = vset.pattern.permute.xlu0 0
        %680 = vperm.xlu0 %679, %v666
        %v681 = vpop.permute.xlu0 %680
        %684 = vset.pattern.permute.xlu0 0
        %685 = vperm.xlu0 %684, %v667
        %v686 = vpop.permute.xlu0 %685
        %v688 = vmul.f32 %v656, %v671
        %v689 = vmul.f32 %v657, %v671
        %v690 = vmul.f32 %v658, %v676
        %v691 = vmul.f32 %v659, %v676
        %v692 = vmul.f32 %v660, %v681
        %v693 = vmul.f32 %v661, %v681
        %v694 = vmul.f32 %v662, %v686
        %v695 = vmul.f32 %v663, %v686
        %v696 = vadd.f32 %v688, %v690
        %v697 = vadd.f32 %v696, %v692
        %v698 = vadd.f32 %v697, %v694
        %v699 = vrot.slane %v698, 4
        %v700 = vadd.f32 %v698, %v699
        %v701 = vrot.slane %v700, 2
        %v702 = vadd.f32 %v700, %v701
        %v703 = vrot.slane %v702, 1
        %v704 = vadd.f32 %v702, %v703
        %v705 = vadd.f32 %v689, %v691
        %v706 = vadd.f32 %v705, %v693
        %v707 = vadd.f32 %v706, %v695
        %v708 = vrot.slane %v707, 4
        %v709 = vadd.f32 %v707, %v708
        %v710 = vrot.slane %v709, 2
        %v711 = vadd.f32 %v709, %v710
        %v712 = vrot.slane %v711, 1
        %v713 = vadd.f32 %v711, %v712
        %v714 = vxor.u32 %v704, 2147483648
        %v715 = vxor.u32 %v713, 2147483648
        %v716 = vmul.f32 %v714, 1.442695
        %v717 = vpow.pop %v716
        %v718 = vmul.f32 %v715, 1.442695
        %v719 = vpow.pop %v718
        %v720 = vadd.f32 %v717, 1.0
        %v721 = vadd.f32 %v719, 1.0
        %v722 = vrcp.pop %v720
        %v723 = vmul.f32 1.0, %v722
        %v724 = vrcp.pop %v721
        %v725 = vmul.f32 1.0, %v724
        %v728 = vcombine.low %v723, %v725
        %v730 = vunpack.c.l.s4 1966171168
        %v731 = vunpack.c.0.s8 %v730
        %v732 = vlaneseq
        %v733 = vshrl.u32 %v732, 7
        %v734 = vsub.s32 %v731, %v733
        %v735 = vrot.slane %v728, %v734
        %v737 = vunpack.c.l.s4 1966171168
        %v738 = vunpack.c.0.s8 %v737
        %v739 = vlaneseq
        %v740 = vshrl.u32 %v739, 7
        %v741 = vsub.s32 %v738, %v740
        %v742 = vrot.slane %v735, %v741
        %v744 = vlaneseq
        %vm745 = vcmp.ge.s32.totalorder %v744, 0
        %vm746 = vcmp.lt.s32.totalorder %v744, 256
        %vm747 = vmand %vm745, %vm746
        %748 = vst.msk [vmem:[%s201] sm:$0x3] %vm747, %v742
        %s749 = sand.u32 %s97, 1
        %s750 = scalar_lea.sflag [#allocation4], %s749
        %s751 = sand.u32 %s97, 1
        %s752 = smul.addr %s751, 2
        %s753 = scalar_lea.vmem [#allocation7], %s752
        // Predicated region
        $region41: #{tpu_custom_call.1} parent=31 // pred_check
          %p754 = pneg %p107
        $region42: #{tpu_custom_call.1} parent=31 // pred_check_branch
          %756 = sbr.rel (%p754) target = $region44
        $region43: #{tpu_custom_call.1} parent=31 // pred_region
          %s757 = smul.u32 2, %s21
          %s759 = ssub.s32 32, 32
          %760 = vsyncadd %s750, %s759
          %s761 = smul.addr %s757, 16
          %s762 = scalar_lea.hbm %s3, %s761
          %s764 = sshll.u32 %s753, 4
          %s765 = int_to_ptr.vmem [resolvable:$true] %s764
          %767 = dma.vmem_to_hbm [thread:$0]  %s765, 32, %s762, %s750
        $region44: #{tpu_custom_call.1} parent=31 // pred_fallthru
          _
      $region32: #{tpu_custom_call.1} parent=5 // pred_fallthru
        _
      %p768 = scmp.le.s32.totalorder 2, %s16
      // Predicated region
      $region45: #{tpu_custom_call.1} parent=5 // pred_check
        %p769 = pneg %p768
      $region46: #{tpu_custom_call.1} parent=5 // pred_check_branch
        %771 = sbr.rel (%p769) target = $region48
      $region47: #{tpu_custom_call.1} parent=5 // pred_region
        %s772 = ssub.s32 %s16, 2
        // Predicated region
        $region49: #{tpu_custom_call.1} parent=47 // pred_check
          %p773 = pneg %p113
        $region50: #{tpu_custom_call.1} parent=47 // pred_check_branch
          %775 = sbr.rel (%p773) target = $region52
        $region51: #{tpu_custom_call.1} parent=47 // pred_region
          %s776 = sand.u32 %s98, 1
          %s777 = scalar_lea.sflag [#allocation4], %s776
          %s778 = sand.u32 %s98, 1
          %s779 = smul.addr %s778, 2
          %s780 = scalar_lea.vmem [#allocation7], %s779
          %781 = dma.done %s777, 32
        $region52: #{tpu_custom_call.1} parent=47 // pred_fallthru
          _
      $region48: #{tpu_custom_call.1} parent=5 // pred_fallthru
        _
    $region6: #{tpu_custom_call.1} parent=1 // loop_footer
      %s20 = sadd.s32 1, %s16
    $region7: #{tpu_custom_call.1} parent=1 // loop_footer_branch
      %15 = sbr.rel target = $region3
    $region8: #{tpu_custom_call.1} parent=1 // loop_exit
      _
    %782 = vsyncpa [#allocation3], 1
    %s783 = scalar_lea.sflag [#allocation3], 1
    %784 = vsyncpa %s783, 1
    %785 = vsyncpa [#allocation6], 1
    %786 = vsyncpa [#allocation4], 1
    %s787 = scalar_lea.sflag [#allocation4], 1
    %788 = vsyncpa %s787, 1

</llo_original>
